<compile_context>
chip_gen: v7x
topology: tpu7x:2x2x1
jax: 0.10.0
libtpu: 0.0.40
codegen_flags: <defaults>
</compile_context>

<pallas_src>
import functools
import math

import jax
import jax.numpy as jnp
from jax.experimental import pallas as pl
from jax.experimental.pallas import tpu as pltpu


_LANES = 128
_SUBLANES = 8
_SINGLE_SHOT_BYTES = 1 << 20   # 3-stream total <= 1 MiB -> single grid step
_MAX_ROW_TILE = 2048           # 3 inputs x 2 bufs x 2048x128x4B = 6 MiB of VMEM


def _round_up(x, m):
    return ((x + m - 1) // m) * m


def _sublane_align(dtype):
    # Sub-32-bit dtypes pack along sublanes: bf16 -> 16 rows, int8/fp8 -> 32.
    return {4: 8, 2: 16, 1: 32}.get(jnp.dtype(dtype).itemsize, 8)


# ---------------------------------------------------------------------------
# Kernels
# ---------------------------------------------------------------------------
def _triplet_single_kernel(a_ref, p_ref, n_ref, out_ref, *, margin):
    """Whole (padded) problem in one grid step: folded reduction + relu.

    out_ref is a (1, 1) SMEM ref — scalar store, no padded VMEM output tile.
    """
    a = a_ref[...].astype(jnp.float32)
    p = p_ref[...].astype(jnp.float32)
    n = n_ref[...].astype(jnp.float32)
    dpos = a - p
    dneg = a - n
    diff = jnp.sum(dpos * dpos - dneg * dneg)          # folded: dp - dn
    out_ref[0, 0] = jnp.maximum(diff + jnp.float32(margin), jnp.float32(0.0))


def _triplet_partial_kernel(a_ref, p_ref, n_ref, out_ref):
    """Per-tile partial reduction to one (8, 128) vreg.

    Body is pure VPU (sub/mul/sub + leading-axis vreg adds, no XLU); each grid
    step writes its own lane-dense (8, 128) output block, so the grid axis is
    a true "parallel" dimension (usable by both v7x TensorCores).  The final
    cross-lane/sublane reduce + margin + relu happens once, in plain JAX.
    """
    a = a_ref[...].astype(jnp.float32)
    p = p_ref[...].astype(jnp.float32)
    n = n_ref[...].astype(jnp.float32)
    dpos = a - p
    dneg = a - n
    d = dpos * dpos - dneg * dneg
    # (row_tile, 128) -> (row_tile//8, 8, 128); sum over the leading axis is
    # elementwise vreg accumulation (layout-preserving, no relayout).
    out_ref[...] = jnp.sum(d.reshape(-1, _SUBLANES, _LANES), axis=0)


# ---------------------------------------------------------------------------
# Wrapper
# ---------------------------------------------------------------------------
def triplet_loss_64_patches(anchor, positive, negative, margin, size_average=True):
    """Pallas implementation of TripletLoss_64_patches.forward.

    anchor/positive/negative: arrays of identical (arbitrary) shape.  Returns a
    float32 scalar.  mean/sum of a scalar loss is the scalar itself, so
    `size_average` is accepted but has no effect.
    """
    assert anchor.shape == positive.shape == negative.shape
    dtype = anchor.dtype
    itemsize = jnp.dtype(dtype).itemsize
    align = _sublane_align(dtype)
    margin = float(margin)

    total = int(math.prod(anchor.shape)) if anchor.shape else 1
    single_shot = 3 * total * itemsize <= _SINGLE_SHOT_BYTES

    # Lay the (flattened) problem out as (rows, 128); pad with zeros so the
    # tile divides exactly.  Zero padding contributes 0 to dp - dn.
    rows = _round_up(pl.cdiv(total, _LANES), align)
    if single_shot:
        row_tile, num_tiles = rows, 1
    else:
        row_tile = min(_MAX_ROW_TILE, _round_up(pl.cdiv(rows, 4), align))
        num_tiles = pl.cdiv(rows, row_tile)
        rows = num_tiles * row_tile
    padded = rows * _LANES

    def _prep(x):
        x = x.reshape(-1)
        if padded != total:
            x = jnp.pad(x, (0, padded - total))
        return x.reshape(rows, _LANES)

    a2, p2, n2 = _prep(anchor), _prep(positive), _prep(negative)

    if single_shot:
        # One grid step: no pipelining needed, whole problem lives in VMEM,
        # scalar result written straight to SMEM.
        out = pl.pallas_call(
            functools.partial(_triplet_single_kernel, margin=margin),
            out_shape=jax.ShapeDtypeStruct((1, 1), jnp.float32),
            grid_spec=pltpu.PrefetchScalarGridSpec(
                num_scalar_prefetch=0,
                grid=(1,),
                in_specs=[
                    pl.BlockSpec((rows, _LANES), lambda i: (0, 0))
                    for _ in range(3)
                ],
                out_specs=pl.BlockSpec(memory_space=pltpu.MemorySpace.SMEM),
            ),
        )(a2, p2, n2)
        return out[0, 0]

    # Tiled, pipelined, parallel path: each step emits one (8, 128) partial.
    partials = pl.pallas_call(
        _triplet_partial_kernel,
        out_shape=jax.ShapeDtypeStruct((num_tiles * _SUBLANES, _LANES), jnp.float32),
        grid_spec=pltpu.PrefetchScalarGridSpec(
            num_scalar_prefetch=0,
            grid=(num_tiles,),
            in_specs=[
                pl.BlockSpec((row_tile, _LANES), lambda i: (i, 0))
                for _ in range(3)
            ],
            out_specs=pl.BlockSpec((_SUBLANES, _LANES), lambda i: (i, 0)),
        ),
        compiler_params=pltpu.CompilerParams(
            dimension_semantics=("parallel",),   # rows split across TCs on v7x
        ),
    )(a2, p2, n2)

    # Tiny epilogue over a few KiB of partials (plain JAX).
    return jnp.maximum(jnp.sum(partials) + jnp.float32(margin), jnp.float32(0.0))


def _reference(anchor, positive, negative, margin):
    dp = jnp.sum((anchor - positive) ** 2)
    dn = jnp.sum((anchor - negative) ** 2)
    return jnp.maximum(dp - dn + margin, 0.0)


if __name__ == "__main__":
    key = jax.random.PRNGKey(0)
    k_a, k_p, k_n = jax.random.split(key, 3)
    margin = 1.0

    # Nominal case: 64 patches x 128-dim embeddings (single-shot path).
    shape = (64, 128)
    anchor = jax.random.normal(k_a, shape, dtype=jnp.float32)
    positive = anchor + 0.3 * jax.random.normal(k_p, shape, dtype=jnp.float32)
    negative = anchor + 0.1 * jax.random.normal(k_n, shape, dtype=jnp.float32)

    loss = jax.block_until_ready(
        triplet_loss_64_patches(anchor, positive, negative, margin))
    ref = _reference(anchor, positive, negative, margin)
    assert jnp.allclose(loss, ref, rtol=1e-4, atol=1e-3), (loss, ref)

    # Slightly larger case exercising the pipelined / parallel tiled path
    # (non-divisor shape -> wrapper padding; still small).
    shape2 = (1500, 96)
    a2 = jax.random.normal(k_a, shape2, dtype=jnp.float32)
    p2 = a2 + 0.3 * jax.random.normal(k_p, shape2, dtype=jnp.float32)
    n2 = a2 + 0.1 * jax.random.normal(k_n, shape2, dtype=jnp.float32)
    loss2 = jax.block_until_ready(
        triplet_loss_64_patches(a2, p2, n2, margin))
    ref2 = _reference(a2, p2, n2, margin)
    assert jnp.allclose(loss2, ref2, rtol=1e-4, atol=1e-3), (loss2, ref2)

    print("KERNEL_OK")
</pallas_src>

<mosaic_0001>
module attributes {stable_mosaic.version = 11 : i64} {
  func.func @_triplet_single_kernel(%arg0: i32, %arg1: memref<64x128xf32, #tpu.memory_space<vmem>>, %arg2: memref<64x128xf32, #tpu.memory_space<vmem>>, %arg3: memref<64x128xf32, #tpu.memory_space<vmem>>, %arg4: memref<1x1xf32, #tpu.memory_space<smem>>) attributes {dimension_semantics = [#tpu.dimension_semantics<arbitrary>], iteration_bounds = array<i64: 1>, scalar_prefetch = 0 : i64, scratch_operands = 0 : i64, tpu.core_type = #tpu.core_type<tc>, window_params = [{pipeline_mode = #tpu.pipeline_mode<synchronous>, transform_indices = @transform_0, window_bounds = array<i64: 64, 128>}, {pipeline_mode = #tpu.pipeline_mode<synchronous>, transform_indices = @transform_1, window_bounds = array<i64: 64, 128>}, {pipeline_mode = #tpu.pipeline_mode<synchronous>, transform_indices = @transform_2, window_bounds = array<i64: 64, 128>}, {transform_indices = @transform_3, window_bounds = array<i64: 1, 1>}]} {
    %c0 = arith.constant 0 : index
    %c0_0 = arith.constant 0 : index
    %0 = vector.load %arg1[%c0, %c0_0] : memref<64x128xf32, #tpu.memory_space<vmem>>, vector<64x128xf32>
    %c0_1 = arith.constant 0 : index
    %c0_2 = arith.constant 0 : index
    %1 = vector.load %arg2[%c0_1, %c0_2] : memref<64x128xf32, #tpu.memory_space<vmem>>, vector<64x128xf32>
    %c0_3 = arith.constant 0 : index
    %c0_4 = arith.constant 0 : index
    %2 = vector.load %arg3[%c0_3, %c0_4] : memref<64x128xf32, #tpu.memory_space<vmem>>, vector<64x128xf32>
    %3 = arith.subf %0, %1 : vector<64x128xf32>
    %4 = arith.subf %0, %2 : vector<64x128xf32>
    %5 = arith.mulf %3, %3 : vector<64x128xf32>
    %6 = arith.mulf %4, %4 : vector<64x128xf32>
    %7 = arith.subf %5, %6 : vector<64x128xf32>
    %8 = vector.shape_cast %7 : vector<64x128xf32> to vector<1x64x128xf32>
    %cst = arith.constant dense<0.000000e+00> : vector<1xf32>
    %9 = vector.multi_reduction <add>, %8, %cst [1, 2] : vector<1x64x128xf32> to vector<1xf32>
    %10 = vector.shape_cast %9 : vector<1xf32> to vector<1x1x1xf32>
    %11 = vector.extract %10[0, 0, 0] : f32 from vector<1x1x1xf32>
    %cst_5 = arith.constant 1.000000e+00 : f32
    %12 = arith.addf %11, %cst_5 : f32
    %cst_6 = arith.constant 0.000000e+00 : f32
    %13 = arith.maximumf %12, %cst_6 : f32
    %c0_7 = arith.constant 0 : index
    %c0_8 = arith.constant 0 : index
    %14 = memref.load %arg4[%c0_7, %c0_8] : memref<1x1xf32, #tpu.memory_space<smem>>
    memref.store %13, %arg4[%c0_7, %c0_8] : memref<1x1xf32, #tpu.memory_space<smem>>
    return
  }
  func.func @transform_0(%arg0: i32) -> (i32, i32) {
    %c0_i32 = arith.constant 0 : i32
    %c0_i32_0 = arith.constant 0 : i32
    %c0_i32_1 = arith.constant 0 : i32
    return %c0_i32, %c0_i32_0 : i32, i32
  }
  func.func @transform_1(%arg0: i32) -> (i32, i32) {
    %c0_i32 = arith.constant 0 : i32
    %c0_i32_0 = arith.constant 0 : i32
    %c0_i32_1 = arith.constant 0 : i32
    return %c0_i32, %c0_i32_0 : i32, i32
  }
  func.func @transform_2(%arg0: i32) -> (i32, i32) {
    %c0_i32 = arith.constant 0 : i32
    %c0_i32_0 = arith.constant 0 : i32
    %c0_i32_1 = arith.constant 0 : i32
    return %c0_i32, %c0_i32_0 : i32, i32
  }
  func.func @transform_3(%arg0: i32) -> (i32, i32) {
    %c0_i32 = arith.constant 0 : i32
    %c0_i32_0 = arith.constant 0 : i32
    %c0_i32_1 = arith.constant 0 : i32
    return %c0_i32, %c0_i32_0 : i32, i32
  }
}

</mosaic_0001>

<llo_original>
// kernel: tpu_custom_call.1
$region0: #{tpu_custom_call.1}
  #allocation0 [shape = 'u32[]', space=smem, size = 0x4, offset = 0x4, fixed_abs, tag = 'smem constant byte address 0x4 - core index']
  #allocation1 [shape = 'u32[144,128]{1,0:T(1,128)}', space=vmem, size = 0x12000, scoped, tag = 'internal scratch']
  %s0 = inlined_call_operand.hbm [shape: f32[64,128], index: 0, kind: input, shape index: {}]
  %s1 = inlined_call_operand.hbm [shape: f32[64,128], index: 1, kind: input, shape index: {}]
  %s2 = inlined_call_operand.hbm [shape: f32[64,128], index: 2, kind: input, shape index: {}]
  %s3 = inlined_call_operand.hbm [shape: f32[1,1], index: 3, kind: output, shape index: {}]
  %s4 = sld [smem:[#allocation0]]
  $region34: #{tpu_custom_call.1} parent=0
    _
  %s6 = ssub.s32 1, %s4
  %s7 = scalar_select 0, %s6, %s4
  $region1: #{tpu_custom_call.1} parent=0
    #allocation2 [shape = 'u8[32768]{0}', space=vmem, size = 0x8000, scoped, tag = 'input window, operand 0, single buffered']
    #allocation3 [shape = 's32[1]{0}', space=sflag, size = 0x4, scoped, tag = 'scoped memory for tpu_custom_call.1']
    #allocation4 [shape = 's32[1]{0}', space=sflag, size = 0x4, scoped, tag = 'scoped memory for tpu_custom_call.1']
    #allocation5 [shape = 'u8[32768]{0}', space=vmem, size = 0x8000, scoped, tag = 'input window, operand 1, single buffered']
    #allocation6 [shape = 's32[1]{0}', space=sflag, size = 0x4, scoped, tag = 'scoped memory for tpu_custom_call.1']
    #allocation7 [shape = 'u8[32768]{0}', space=vmem, size = 0x8000, scoped, tag = 'input window, operand 2, single buffered']
    #allocation8 [shape = 'u8[512]{0}', space=smem, size = 0x200, scoped, tag = 'output window, operand 0, single buffered']
    %8 = vsyncpa [#allocation3], 0
    %9 = vsyncpa [#allocation6], 0
    %10 = vsyncpa [#allocation4], 0
    // Predicated region
    $region2: #{tpu_custom_call.1} parent=1 // pred_check
      _
    $region3: #{tpu_custom_call.1} parent=1 // pred_check_branch
      %12 = sbr.rel (0) target = $region5
    $region4: #{tpu_custom_call.1} parent=1 // pred_region
      %s14 = ssub.s32 1024, 1024
      %15 = vsyncadd [#allocation3], %s14
      %s16 = sshll.u32 [#allocation2], 4
      %s17 = int_to_ptr.vmem [resolvable:$true] %s16
      %22 = dma.hbm_to_vmem [thread:$0]  %s0, 1024, %s17, [#allocation3], 128, 128, 8
    $region5: #{tpu_custom_call.1} parent=1 // pred_fallthru
      _
    // Predicated region
    $region6: #{tpu_custom_call.1} parent=1 // pred_check
      _
    $region7: #{tpu_custom_call.1} parent=1 // pred_check_branch
      %24 = sbr.rel (0) target = $region9
    $region8: #{tpu_custom_call.1} parent=1 // pred_region
      %s26 = ssub.s32 1024, 1024
      %27 = vsyncadd [#allocation6], %s26
      %s28 = sshll.u32 [#allocation5], 4
      %s29 = int_to_ptr.vmem [resolvable:$true] %s28
      %34 = dma.hbm_to_vmem [thread:$0]  %s1, 1024, %s29, [#allocation6], 128, 128, 8
    $region9: #{tpu_custom_call.1} parent=1 // pred_fallthru
      _
    // Predicated region
    $region10: #{tpu_custom_call.1} parent=1 // pred_check
      _
    $region11: #{tpu_custom_call.1} parent=1 // pred_check_branch
      %36 = sbr.rel (0) target = $region13
    $region12: #{tpu_custom_call.1} parent=1 // pred_region
      %s38 = ssub.s32 1024, 1024
      %39 = vsyncadd [#allocation6], %s38
      %s40 = sshll.u32 [#allocation7], 4
      %s41 = int_to_ptr.vmem [resolvable:$true] %s40
      %46 = dma.hbm_to_vmem [thread:$0]  %s2, 1024, %s41, [#allocation6], 128, 128, 8
    $region13: #{tpu_custom_call.1} parent=1 // pred_fallthru
      _
    // Predicated region
    $region14: #{tpu_custom_call.1} parent=1 // pred_check
      _
    $region15: #{tpu_custom_call.1} parent=1 // pred_check_branch
      %48 = sbr.rel (0) target = $region17
    $region16: #{tpu_custom_call.1} parent=1 // pred_region
      %49 = dma.done [#allocation3], 1024
    $region17: #{tpu_custom_call.1} parent=1 // pred_fallthru
      _
    // Predicated region
    $region18: #{tpu_custom_call.1} parent=1 // pred_check
      _
    $region19: #{tpu_custom_call.1} parent=1 // pred_check_branch
      %51 = sbr.rel (0) target = $region21
    $region20: #{tpu_custom_call.1} parent=1 // pred_region
      %52 = dma.done [#allocation6], 1024
    $region21: #{tpu_custom_call.1} parent=1 // pred_fallthru
      _
    // Predicated region
    $region22: #{tpu_custom_call.1} parent=1 // pred_check
      _
    $region23: #{tpu_custom_call.1} parent=1 // pred_check_branch
      %54 = sbr.rel (0) target = $region25
    $region24: #{tpu_custom_call.1} parent=1 // pred_region
      %55 = dma.done [#allocation6], 1024
    $region25: #{tpu_custom_call.1} parent=1 // pred_fallthru
      _
    %v56 = vld [vmem:[#allocation2] sm:$0xff]
    %v57 = vld [vmem:[#allocation2 + $0x8] sm:$0xff]
    %v58 = vld [vmem:[#allocation2 + $0x10] sm:$0xff]
    %v59 = vld [vmem:[#allocation2 + $0x18] sm:$0xff]
    %v60 = vld [vmem:[#allocation2 + $0x20] sm:$0xff]
    %v61 = vld [vmem:[#allocation2 + $0x28] sm:$0xff]
    %v62 = vld [vmem:[#allocation2 + $0x30] sm:$0xff]
    %v63 = vld [vmem:[#allocation2 + $0x38] sm:$0xff]
    %v64 = vld [vmem:[#allocation5] sm:$0xff]
    %v65 = vld [vmem:[#allocation5 + $0x8] sm:$0xff]
    %v66 = vld [vmem:[#allocation5 + $0x10] sm:$0xff]
    %v67 = vld [vmem:[#allocation5 + $0x18] sm:$0xff]
    %v68 = vld [vmem:[#allocation5 + $0x20] sm:$0xff]
    %v69 = vld [vmem:[#allocation5 + $0x28] sm:$0xff]
    %v70 = vld [vmem:[#allocation5 + $0x30] sm:$0xff]
    %v71 = vld [vmem:[#allocation5 + $0x38] sm:$0xff]
    %v72 = vld [vmem:[#allocation7] sm:$0xff]
    %v73 = vld [vmem:[#allocation7 + $0x8] sm:$0xff]
    %v74 = vld [vmem:[#allocation7 + $0x10] sm:$0xff]
    %v75 = vld [vmem:[#allocation7 + $0x18] sm:$0xff]
    %v76 = vld [vmem:[#allocation7 + $0x20] sm:$0xff]
    %v77 = vld [vmem:[#allocation7 + $0x28] sm:$0xff]
    %v78 = vld [vmem:[#allocation7 + $0x30] sm:$0xff]
    %v79 = vld [vmem:[#allocation7 + $0x38] sm:$0xff]
    %v80 = vsub.f32 %v56, %v64
    %v81 = vsub.f32 %v57, %v65
    %v82 = vsub.f32 %v58, %v66
    %v83 = vsub.f32 %v59, %v67
    %v84 = vsub.f32 %v60, %v68
    %v85 = vsub.f32 %v61, %v69
    %v86 = vsub.f32 %v62, %v70
    %v87 = vsub.f32 %v63, %v71
    %v88 = vsub.f32 %v56, %v72
    %v89 = vsub.f32 %v57, %v73
    %v90 = vsub.f32 %v58, %v74
    %v91 = vsub.f32 %v59, %v75
    %v92 = vsub.f32 %v60, %v76
    %v93 = vsub.f32 %v61, %v77
    %v94 = vsub.f32 %v62, %v78
    %v95 = vsub.f32 %v63, %v79
    %v96 = vmul.f32 %v80, %v80
    %v97 = vmul.f32 %v81, %v81
    %v98 = vmul.f32 %v82, %v82
    %v99 = vmul.f32 %v83, %v83
    %v100 = vmul.f32 %v84, %v84
    %v101 = vmul.f32 %v85, %v85
    %v102 = vmul.f32 %v86, %v86
    %v103 = vmul.f32 %v87, %v87
    %v104 = vmul.f32 %v88, %v88
    %v105 = vmul.f32 %v89, %v89
    %v106 = vmul.f32 %v90, %v90
    %v107 = vmul.f32 %v91, %v91
    %v108 = vmul.f32 %v92, %v92
    %v109 = vmul.f32 %v93, %v93
    %v110 = vmul.f32 %v94, %v94
    %v111 = vmul.f32 %v95, %v95
    %v112 = vsub.f32 %v96, %v104
    %v113 = vsub.f32 %v97, %v105
    %v114 = vsub.f32 %v98, %v106
    %v115 = vsub.f32 %v99, %v107
    %v116 = vsub.f32 %v100, %v108
    %v117 = vsub.f32 %v101, %v109
    %v118 = vsub.f32 %v102, %v110
    %v119 = vsub.f32 %v103, %v111
    %v120 = vadd.f32 %v112, %v113
    %v121 = vadd.f32 %v120, %v114
    %v122 = vadd.f32 %v121, %v115
    %v123 = vadd.f32 %v122, %v116
    %v124 = vadd.f32 %v123, %v117
    %v125 = vadd.f32 %v124, %v118
    %v126 = vadd.f32 %v125, %v119
    %127 = vadd.xlane.f32.xlu0 %v126
    %v128 = vpop.xlane.xlu0 %127
    %v129 = vrot.slane %v128, 4
    %v130 = vadd.f32 %v128, %v129
    %v131 = vrot.slane %v130, 2
    %v132 = vadd.f32 %v130, %v131
    %v133 = vrot.slane %v132, 1
    %v134 = vadd.f32 %v132, %v133
    %s135 = vtos %v134
    %s136 = sadd.f32 %s135, 1.0
    %s137 = smax.f32 %s136, 0.0
    %s138 = scalar_lea.smem [#allocation8], 0
    %139 = sst [smem:[%s138]] %s137
    // Predicated region
    $region26: #{tpu_custom_call.1} parent=1 // pred_check
      _
    $region27: #{tpu_custom_call.1} parent=1 // pred_check_branch
      %141 = sbr.rel (0) target = $region29
    $region28: #{tpu_custom_call.1} parent=1 // pred_region
      %s143 = ssub.s32 16, 16
      %144 = vsyncadd [#allocation4], %s143
      %147 = dma.smem_to_hbm [#allocation8], 16, %s3, [#allocation4]
    $region29: #{tpu_custom_call.1} parent=1 // pred_fallthru
      _
    // Predicated region
    $region30: #{tpu_custom_call.1} parent=1 // pred_check
      _
    $region31: #{tpu_custom_call.1} parent=1 // pred_check_branch
      %149 = sbr.rel (0) target = $region33
    $region32: #{tpu_custom_call.1} parent=1 // pred_region
      %150 = dma.done [#allocation4], 16
    $region33: #{tpu_custom_call.1} parent=1 // pred_fallthru
      _
    %151 = sfence
    %152 = vsyncpa [#allocation3], 1
    %153 = vsyncpa [#allocation6], 1
    %154 = vsyncpa [#allocation4], 1

</llo_original>
